<compile_context>
chip_gen: v7x
topology: tpu7x:2x2x1
jax: 0.10.0
libtpu: 0.0.40
codegen_flags: <defaults>
</compile_context>

<pallas_src>
import jax
import jax.numpy as jnp
from jax.experimental import pallas as pl
from jax.experimental.pallas import tpu as pltpu

LANE = 128
SUBLANE = 8


def _round_up(x, m):
    return (x + m - 1) // m * m


# ------------------------------------------------------------------ kernel ---

def actor_kernel(x_ref, w1_ref, b1_ref, w2_ref, b2_ref, w3_ref, b3_ref, out_ref):
    """Fused 3-layer MLP for one batch tile: relu(xW1+b1) -> relu(.W2+b2) -> tanh(.W3+b3).

    Matmuls run on the MXU with f32 accumulation; bias add / ReLU / tanh stay in f32.
    The operand cast (f32 -> bf16 when bf16 weights are used) is fused into the kernel."""
    x = x_ref[...].astype(w1_ref.dtype)
    h = jnp.dot(x, w1_ref[...], preferred_element_type=jnp.float32) + b1_ref[...]
    h = jnp.maximum(h, 0.0)
    h = jnp.dot(h.astype(w2_ref.dtype), w2_ref[...],
                preferred_element_type=jnp.float32) + b2_ref[...]
    h = jnp.maximum(h, 0.0)
    h = jnp.dot(h.astype(w3_ref.dtype), w3_ref[...],
                preferred_element_type=jnp.float32) + b3_ref[...]
    out_ref[...] = jnp.tanh(h).astype(out_ref.dtype)


# ---------------------------------------------------------------- params -----

def prepare_params(params, compute_dtype=jnp.float32):
    """One-time conversion of PyTorch-convention params into kernel layout.

    nn.Linear stores weight [out, in], bias [out]; the kernel wants W as [in, out]
    (so `x @ W` maps straight onto the MXU) and b as [1, out] (f32 epilogue).
    compute_dtype=jnp.bfloat16 is the recommended production setting on v6e/v7x
    (halves weight/activation operand bytes; accumulation stays f32).
    Call ONCE at init time, never per forward step.
    Note: for v5e-MXU-bound widths you would additionally zero-pad state/hidden to
    multiples of 128 here; the default hidden=256 is already aligned."""
    return {
        "w1": params["w1"].T.astype(compute_dtype),       # [state,  hidden]
        "b1": params["b1"][None, :].astype(jnp.float32),  # [1, hidden]
        "w2": params["w2"].T.astype(compute_dtype),       # [hidden, hidden]
        "b2": params["b2"][None, :].astype(jnp.float32),
        "w3": params["w3"].T.astype(compute_dtype),       # [hidden, action]  (no lane padding)
        "b3": params["b3"][None, :].astype(jnp.float32),
    }


# ---------------------------------------------------------------- wrapper ----

def _choose_batch_tile(B):
    """Batch tile selection.

    - multiple of 8 (sublane)
    - large (up to 1024 rows) to amortize the ~0.35us per-grid-step overhead
    - for large B: an EVEN number of tiles (>=2) so v7x's 2 TensorCores split the
      "parallel" batch axis (harmless on v5e/v6e)
    - prefers tiles that divide B exactly to avoid a wrapper-side pad pass over x."""
    B8 = _round_up(max(B, 1), SUBLANE)
    if B8 <= 512:
        return B8                                   # single grid step
    n_tiles = 2 * pl.cdiv(B8, 2048)                 # even, each tile <= 1024 rows
    if B % (n_tiles * SUBLANE) == 0:
        return B // n_tiles                         # exact divisor -> no x padding
    return _round_up(pl.cdiv(B8, n_tiles), SUBLANE)


def _estimate_vmem_bytes(tb, state_size, kp, single_buffer=True):
    w_bytes = sum(kp[k].size * kp[k].dtype.itemsize
                  for k in ("w1", "b1", "w2", "b2", "w3", "b3"))
    w_bytes *= 1 if single_buffer else 2
    hidden = kp["w1"].shape[1]
    action = kp["w3"].shape[1]
    io = 2 * tb * (state_size + action) * 4         # double-buffered x / out tiles
    act = 3 * tb * hidden * 4                       # in-kernel activation temporaries (f32)
    return w_bytes + io + act


def _pallas_forward(x_in, kp, tb, vmem_limit_bytes, single_buffer_weights):
    w1, b1 = kp["w1"], kp["b1"]
    w2, b2 = kp["w2"], kp["b2"]
    w3, b3 = kp["w3"], kp["b3"]
    b_pad, state_size = x_in.shape
    action_size = w3.shape[1]

    if single_buffer_weights:
        # Constant index_map -> data never changes across grid steps; single-buffer it
        # so weights are not duplicated in VMEM (matters at large hidden on v7x/v5e).
        def wspec(shape):
            return pl.BlockSpec(shape, lambda i: (0, 0), pipeline_mode=pl.Buffered(1))
    else:
        def wspec(shape):
            return pl.BlockSpec(shape, lambda i: (0, 0))

    cparams = {"dimension_semantics": ("parallel",)}
    if vmem_limit_bytes is not None:
        cparams["vmem_limit_bytes"] = int(vmem_limit_bytes)

    return pl.pallas_call(
        actor_kernel,
        out_shape=jax.ShapeDtypeStruct((b_pad, action_size), jnp.float32),
        grid=(b_pad // tb,),
        in_specs=[
            pl.BlockSpec((tb, state_size), lambda i: (i, 0)),   # x: tiled over batch
            wspec(w1.shape), wspec(b1.shape),                   # weights/biases: VMEM-resident
            wspec(w2.shape), wspec(b2.shape),
            wspec(w3.shape), wspec(b3.shape),
        ],
        # Output at its true width: block last dim == full array dim (no lane padding,
        # no inflated HBM writeback, no extra wrapper slice pass).
        out_specs=pl.BlockSpec((tb, action_size), lambda i: (i, 0)),
        compiler_params=pltpu.CompilerParams(**cparams),
    )(x_in, w1, b1, w2, b2, w3, b3)


def _forward_jnp(x, kp):
    cd = kp["w1"].dtype
    h = jax.nn.relu(jnp.dot(x.astype(cd), kp["w1"],
                            preferred_element_type=jnp.float32) + kp["b1"])
    h = jax.nn.relu(jnp.dot(h.astype(cd), kp["w2"],
                            preferred_element_type=jnp.float32) + kp["b2"])
    return jnp.tanh(jnp.dot(h.astype(cd), kp["w3"],
                            preferred_element_type=jnp.float32) + kp["b3"])


def actor_forward(x, kp, *, batch_tile=None, vmem_limit_bytes=None, jnp_fallback_below=0):
    """x: [B, state_size] float32. kp: output of prepare_params().

    Set jnp_fallback_below (e.g. 64) for latency-critical single-observation RL
    inference, where the pallas_call launch overhead dominates; the demo keeps it 0
    so the kernel path is exercised."""
    B, state_size = x.shape
    if B < jnp_fallback_below:
        return _forward_jnp(x, kp)

    tb = _round_up(batch_tile, SUBLANE) if batch_tile is not None else _choose_batch_tile(B)
    b_pad = _round_up(B, tb)

    if b_pad != B:
        # Only hit for ragged batches that no multiple-of-8 tile divides exactly.
        x_in = jnp.zeros((b_pad, state_size), x.dtype).at[:B].set(x)
    else:
        x_in = x

    if vmem_limit_bytes is None:
        est = _estimate_vmem_bytes(tb, state_size, kp)
        if est > 24 * 1024 * 1024:                       # approaching v7x's 32 MiB scoped default
            vmem_limit_bytes = min(int(est * 1.25), 128 * 1024 * 1024)

    try:
        out = _pallas_forward(x_in, kp, tb, vmem_limit_bytes, single_buffer_weights=True)
    except Exception:
        # pl.Buffered(1) not accepted by this jax version -> default double buffering.
        out = _pallas_forward(x_in, kp, tb, vmem_limit_bytes, single_buffer_weights=False)

    return out[:B] if b_pad != B else out


# ---------------------------------------------------------------- utilities --

def init_params(key, state_size, action_size, hidden_size):
    """Deterministic init mimicking nn.Linear default (uniform +/- 1/sqrt(fan_in))."""
    ks = jax.random.split(key, 6)

    def linear_init(kw, kb, out_f, in_f):
        bound = 1.0 / jnp.sqrt(jnp.float32(in_f))
        w = jax.random.uniform(kw, (out_f, in_f), jnp.float32, -bound, bound)
        b = jax.random.uniform(kb, (out_f,), jnp.float32, -bound, bound)
        return w, b

    w1, b1 = linear_init(ks[0], ks[1], hidden_size, state_size)
    w2, b2 = linear_init(ks[2], ks[3], hidden_size, hidden_size)
    w3, b3 = linear_init(ks[4], ks[5], action_size, hidden_size)
    return {"w1": w1, "b1": b1, "w2": w2, "b2": b2, "w3": w3, "b3": b3}


def actor_reference(x, p):
    h1 = jnp.maximum(x @ p["w1"].T + p["b1"], 0.0)
    h2 = jnp.maximum(h1 @ p["w2"].T + p["b2"], 0.0)
    return jnp.tanh(h2 @ p["w3"].T + p["b3"])


# ------------------------------------------------------------------- main ----

if __name__ == "__main__":
    key = jax.random.PRNGKey(0)
    k_param, k_x, k_xb = jax.random.split(key, 3)

    # Small shapes consistent with the Actor module.
    batch = 2
    state_size = 16
    hidden_size = 32
    action_size = 4

    params = init_params(k_param, state_size, action_size, hidden_size)
    kp_f32 = prepare_params(params)                         # f32 compute (tight numeric check)

    # Small-batch case (single grid step, padded batch rows sliced off).
    x = jax.random.normal(k_x, (batch, state_size), jnp.float32)
    out = jax.block_until_ready(actor_forward(x, kp_f32))
    ref = actor_reference(x, params)
    assert out.shape == (batch, action_size)
    assert jnp.allclose(out, ref, atol=1e-3, rtol=1e-3)

    # Larger batch exercising the multi-tile parallel grid (2 tiles of 512, no x padding).
    xb = jax.random.normal(k_xb, (1024, state_size), jnp.float32)
    outb = jax.block_until_ready(actor_forward(xb, kp_f32))
    refb = actor_reference(xb, params)
    assert outb.shape == (1024, action_size)
    assert jnp.allclose(outb, refb, atol=1e-3, rtol=1e-3)

    # bf16-operand production path (f32 accumulate / epilogue), relaxed tolerance.
    kp_bf16 = prepare_params(params, compute_dtype=jnp.bfloat16)
    outb16 = jax.block_until_ready(actor_forward(xb, kp_bf16))
    assert outb16.shape == (1024, action_size)
    assert jnp.allclose(outb16, refb, atol=5e-2, rtol=5e-2)

    print("KERNEL_OK")
</pallas_src>

<mosaic_0001>
module attributes {stable_mosaic.version = 11 : i64} {
  func.func @actor_kernel(%arg0: i32, %arg1: memref<8x16xf32, #tpu.memory_space<vmem>>, %arg2: memref<16x32xf32, #tpu.memory_space<vmem>>, %arg3: memref<1x32xf32, #tpu.memory_space<vmem>>, %arg4: memref<32x32xf32, #tpu.memory_space<vmem>>, %arg5: memref<1x32xf32, #tpu.memory_space<vmem>>, %arg6: memref<32x4xf32, #tpu.memory_space<vmem>>, %arg7: memref<1x4xf32, #tpu.memory_space<vmem>>, %arg8: memref<8x4xf32, #tpu.memory_space<vmem>>) attributes {dimension_semantics = [#tpu.dimension_semantics<parallel>], iteration_bounds = array<i64: 1>, scalar_prefetch = 0 : i64, scratch_operands = 0 : i64, tpu.core_type = #tpu.core_type<tc>, window_params = [{transform_indices = @transform_0, window_bounds = array<i64: 8, 16>}, {pipeline_mode = #tpu.pipeline_mode<synchronous>, transform_indices = @transform_1, window_bounds = array<i64: 16, 32>}, {pipeline_mode = #tpu.pipeline_mode<synchronous>, transform_indices = @transform_2, window_bounds = array<i64: 1, 32>}, {pipeline_mode = #tpu.pipeline_mode<synchronous>, transform_indices = @transform_3, window_bounds = array<i64: 32, 32>}, {pipeline_mode = #tpu.pipeline_mode<synchronous>, transform_indices = @transform_4, window_bounds = array<i64: 1, 32>}, {pipeline_mode = #tpu.pipeline_mode<synchronous>, transform_indices = @transform_5, window_bounds = array<i64: 32, 4>}, {pipeline_mode = #tpu.pipeline_mode<synchronous>, transform_indices = @transform_6, window_bounds = array<i64: 1, 4>}, {transform_indices = @transform_7, window_bounds = array<i64: 8, 4>}]} {
    %c0 = arith.constant 0 : index
    %c0_0 = arith.constant 0 : index
    %0 = vector.load %arg1[%c0, %c0_0] : memref<8x16xf32, #tpu.memory_space<vmem>>, vector<8x16xf32>
    %c0_1 = arith.constant 0 : index
    %c0_2 = arith.constant 0 : index
    %1 = vector.load %arg2[%c0_1, %c0_2] : memref<16x32xf32, #tpu.memory_space<vmem>>, vector<16x32xf32>
    %cst = arith.constant dense<0.000000e+00> : vector<8x32xf32>
    %2 = tpu.matmul %0, %1, %cst {dimension_numbers = #tpu.dot_dimension_numbers<[1], [0], [0], [1], [0, 0, 1, 1], [], []>} : vector<8x16xf32>, vector<16x32xf32>, vector<8x32xf32> -> vector<8x32xf32>
    %c0_3 = arith.constant 0 : index
    %c0_4 = arith.constant 0 : index
    %3 = vector.load %arg3[%c0_3, %c0_4] : memref<1x32xf32, #tpu.memory_space<vmem>>, vector<1x32xf32>
    %4 = vector.broadcast %3 : vector<1x32xf32> to vector<8x32xf32>
    %5 = arith.addf %2, %4 : vector<8x32xf32>
    %cst_5 = arith.constant 0.000000e+00 : f32
    %6 = vector.broadcast %cst_5 : f32 to vector<8x32xf32>
    %7 = arith.maximumf %5, %6 : vector<8x32xf32>
    %c0_6 = arith.constant 0 : index
    %c0_7 = arith.constant 0 : index
    %8 = vector.load %arg4[%c0_6, %c0_7] : memref<32x32xf32, #tpu.memory_space<vmem>>, vector<32x32xf32>
    %cst_8 = arith.constant dense<0.000000e+00> : vector<8x32xf32>
    %9 = tpu.matmul %7, %8, %cst_8 {dimension_numbers = #tpu.dot_dimension_numbers<[1], [0], [0], [1], [0, 0, 1, 1], [], []>} : vector<8x32xf32>, vector<32x32xf32>, vector<8x32xf32> -> vector<8x32xf32>
    %c0_9 = arith.constant 0 : index
    %c0_10 = arith.constant 0 : index
    %10 = vector.load %arg5[%c0_9, %c0_10] : memref<1x32xf32, #tpu.memory_space<vmem>>, vector<1x32xf32>
    %11 = vector.broadcast %10 : vector<1x32xf32> to vector<8x32xf32>
    %12 = arith.addf %9, %11 : vector<8x32xf32>
    %cst_11 = arith.constant 0.000000e+00 : f32
    %13 = vector.broadcast %cst_11 : f32 to vector<8x32xf32>
    %14 = arith.maximumf %12, %13 : vector<8x32xf32>
    %c0_12 = arith.constant 0 : index
    %c0_13 = arith.constant 0 : index
    %15 = vector.load %arg6[%c0_12, %c0_13] : memref<32x4xf32, #tpu.memory_space<vmem>>, vector<32x4xf32>
    %cst_14 = arith.constant dense<0.000000e+00> : vector<8x4xf32>
    %16 = tpu.matmul %14, %15, %cst_14 {dimension_numbers = #tpu.dot_dimension_numbers<[1], [0], [0], [1], [0, 0, 1, 1], [], []>} : vector<8x32xf32>, vector<32x4xf32>, vector<8x4xf32> -> vector<8x4xf32>
    %c0_15 = arith.constant 0 : index
    %c0_16 = arith.constant 0 : index
    %17 = vector.load %arg7[%c0_15, %c0_16] : memref<1x4xf32, #tpu.memory_space<vmem>>, vector<1x4xf32>
    %18 = vector.broadcast %17 : vector<1x4xf32> to vector<8x4xf32>
    %19 = arith.addf %16, %18 : vector<8x4xf32>
    %20 = math.tanh %19 : vector<8x4xf32>
    %c0_17 = arith.constant 0 : index
    %c0_18 = arith.constant 0 : index
    %21 = vector.load %arg8[%c0_17, %c0_18] : memref<8x4xf32, #tpu.memory_space<vmem>>, vector<8x4xf32>
    tpu.vector_store %arg8[%c0_17, %c0_18], %20 {strides = array<i32>} : memref<8x4xf32, #tpu.memory_space<vmem>>, vector<8x4xf32>,
    return
  }
  func.func @transform_0(%arg0: i32) -> (i32, i32) {
    %c0_i32 = arith.constant 0 : i32
    %c0_i32_0 = arith.constant 0 : i32
    return %arg0, %c0_i32 : i32, i32
  }
  func.func @transform_1(%arg0: i32) -> (i32, i32) {
    %c0_i32 = arith.constant 0 : i32
    %c0_i32_0 = arith.constant 0 : i32
    %c0_i32_1 = arith.constant 0 : i32
    return %c0_i32, %c0_i32_0 : i32, i32
  }
  func.func @transform_2(%arg0: i32) -> (i32, i32) {
    %c0_i32 = arith.constant 0 : i32
    %c0_i32_0 = arith.constant 0 : i32
    %c0_i32_1 = arith.constant 0 : i32
    return %c0_i32, %c0_i32_0 : i32, i32
  }
  func.func @transform_3(%arg0: i32) -> (i32, i32) {
    %c0_i32 = arith.constant 0 : i32
    %c0_i32_0 = arith.constant 0 : i32
    %c0_i32_1 = arith.constant 0 : i32
    return %c0_i32, %c0_i32_0 : i32, i32
  }
  func.func @transform_4(%arg0: i32) -> (i32, i32) {
    %c0_i32 = arith.constant 0 : i32
    %c0_i32_0 = arith.constant 0 : i32
    %c0_i32_1 = arith.constant 0 : i32
    return %c0_i32, %c0_i32_0 : i32, i32
  }
  func.func @transform_5(%arg0: i32) -> (i32, i32) {
    %c0_i32 = arith.constant 0 : i32
    %c0_i32_0 = arith.constant 0 : i32
    %c0_i32_1 = arith.constant 0 : i32
    return %c0_i32, %c0_i32_0 : i32, i32
  }
  func.func @transform_6(%arg0: i32) -> (i32, i32) {
    %c0_i32 = arith.constant 0 : i32
    %c0_i32_0 = arith.constant 0 : i32
    %c0_i32_1 = arith.constant 0 : i32
    return %c0_i32, %c0_i32_0 : i32, i32
  }
  func.func @transform_7(%arg0: i32) -> (i32, i32) {
    %c0_i32 = arith.constant 0 : i32
    %c0_i32_0 = arith.constant 0 : i32
    return %arg0, %c0_i32 : i32, i32
  }
}

module attributes {stable_mosaic.version = 11 : i64} {
  func.func @actor_kernel(%arg0: i32, %arg1: memref<8x16xf32, #tpu.memory_space<vmem>>, %arg2: memref<16x32xf32, #tpu.memory_space<vmem>>, %arg3: memref<1x32xf32, #tpu.memory_space<vmem>>, %arg4: memref<32x32xf32, #tpu.memory_space<vmem>>, %arg5: memref<1x32xf32, #tpu.memory_space<vmem>>, %arg6: memref<32x4xf32, #tpu.memory_space<vmem>>, %arg7: memref<1x4xf32, #tpu.memory_space<vmem>>, %arg8: memref<8x4xf32, #tpu.memory_space<vmem>>) attributes {dimension_semantics = [#tpu.dimension_semantics<parallel>], iteration_bounds = array<i64: 1>, scalar_prefetch = 0 : i64, scratch_operands = 0 : i64, tpu.core_type = #tpu.core_type<tc>, window_params = [{transform_indices = @transform_0, window_bounds = array<i64: 8, 16>}, {pipeline_mode = #tpu.pipeline_mode<synchronous>, transform_indices = @transform_1, window_bounds = array<i64: 16, 32>}, {pipeline_mode = #tpu.pipeline_mode<synchronous>, transform_indices = @transform_2, window_bounds = array<i64: 1, 32>}, {pipeline_mode = #tpu.pipeline_mode<synchronous>, transform_indices = @transform_3, window_bounds = array<i64: 32, 32>}, {pipeline_mode = #tpu.pipeline_mode<synchronous>, transform_indices = @transform_4, window_bounds = array<i64: 1, 32>}, {pipeline_mode = #tpu.pipeline_mode<synchronous>, transform_indices = @transform_5, window_bounds = array<i64: 32, 4>}, {pipeline_mode = #tpu.pipeline_mode<synchronous>, transform_indices = @transform_6, window_bounds = array<i64: 1, 4>}, {transform_indices = @transform_7, window_bounds = array<i64: 8, 4>}]} {
    %c0 = arith.constant 0 : index
    %c0_0 = arith.constant 0 : index
    %0 = vector.load %arg1[%c0, %c0_0] : memref<8x16xf32, #tpu.memory_space<vmem>>, vector<8x16xf32>
    %c0_1 = arith.constant 0 : index
    %c0_2 = arith.constant 0 : index
    %1 = vector.load %arg2[%c0_1, %c0_2] : memref<16x32xf32, #tpu.memory_space<vmem>>, vector<16x32xf32>
    %cst = arith.constant dense<0.000000e+00> : vector<8x32xf32>
    %2 = tpu.matmul %0, %1, %cst {dimension_numbers = #tpu.dot_dimension_numbers<[1], [0], [0], [1], [0, 0, 1, 1], [], []>} : vector<8x16xf32>, vector<16x32xf32>, vector<8x32xf32> -> vector<8x32xf32>
    %c0_3 = arith.constant 0 : index
    %c0_4 = arith.constant 0 : index
    %3 = vector.load %arg3[%c0_3, %c0_4] : memref<1x32xf32, #tpu.memory_space<vmem>>, vector<1x32xf32>
    %4 = vector.broadcast %3 : vector<1x32xf32> to vector<8x32xf32>
    %5 = arith.addf %2, %4 : vector<8x32xf32>
    %cst_5 = arith.constant 0.000000e+00 : f32
    %6 = vector.broadcast %cst_5 : f32 to vector<8x32xf32>
    %7 = arith.maximumf %5, %6 : vector<8x32xf32>
    %c0_6 = arith.constant 0 : index
    %c0_7 = arith.constant 0 : index
    %8 = vector.load %arg4[%c0_6, %c0_7] : memref<32x32xf32, #tpu.memory_space<vmem>>, vector<32x32xf32>
    %cst_8 = arith.constant dense<0.000000e+00> : vector<8x32xf32>
    %9 = tpu.matmul %7, %8, %cst_8 {dimension_numbers = #tpu.dot_dimension_numbers<[1], [0], [0], [1], [0, 0, 1, 1], [], []>} : vector<8x32xf32>, vector<32x32xf32>, vector<8x32xf32> -> vector<8x32xf32>
    %c0_9 = arith.constant 0 : index
    %c0_10 = arith.constant 0 : index
    %10 = vector.load %arg5[%c0_9, %c0_10] : memref<1x32xf32, #tpu.memory_space<vmem>>, vector<1x32xf32>
    %11 = vector.broadcast %10 : vector<1x32xf32> to vector<8x32xf32>
    %12 = arith.addf %9, %11 : vector<8x32xf32>
    %cst_11 = arith.constant 0.000000e+00 : f32
    %13 = vector.broadcast %cst_11 : f32 to vector<8x32xf32>
    %14 = arith.maximumf %12, %13 : vector<8x32xf32>
    %c0_12 = arith.constant 0 : index
    %c0_13 = arith.constant 0 : index
    %15 = vector.load %arg6[%c0_12, %c0_13] : memref<32x4xf32, #tpu.memory_space<vmem>>, vector<32x4xf32>
    %cst_14 = arith.constant dense<0.000000e+00> : vector<8x4xf32>
    %16 = tpu.matmul %14, %15, %cst_14 {dimension_numbers = #tpu.dot_dimension_numbers<[1], [0], [0], [1], [0, 0, 1, 1], [], []>} : vector<8x32xf32>, vector<32x4xf32>, vector<8x4xf32> -> vector<8x4xf32>
    %c0_15 = arith.constant 0 : index
    %c0_16 = arith.constant 0 : index
    %17 = vector.load %arg7[%c0_15, %c0_16] : memref<1x4xf32, #tpu.memory_space<vmem>>, vector<1x4xf32>
    %18 = vector.broadcast %17 : vector<1x4xf32> to vector<8x4xf32>
    %19 = arith.addf %16, %18 : vector<8x4xf32>
    %20 = math.tanh %19 : vector<8x4xf32>
    %c0_17 = arith.constant 0 : index
    %c0_18 = arith.constant 0 : index
    %21 = vector.load %arg8[%c0_17, %c0_18] : memref<8x4xf32, #tpu.memory_space<vmem>>, vector<8x4xf32>
    tpu.vector_store %arg8[%c0_17, %c0_18], %20 {strides = array<i32>} : memref<8x4xf32, #tpu.memory_space<vmem>>, vector<8x4xf32>,
    return
  }
  func.func @transform_0(%arg0: i32) -> (i32, i32) {
    %c0_i32 = arith.constant 0 : i32
    %c0_i32_0 = arith.constant 0 : i32
    return %arg0, %c0_i32 : i32, i32
  }
  func.func @transform_1(%arg0: i32) -> (i32, i32) {
    %c0_i32 = arith.constant 0 : i32
    %c0_i32_0 = arith.constant 0 : i32
    %c0_i32_1 = arith.constant 0 : i32
    return %c0_i32, %c0_i32_0 : i32, i32
  }
  func.func @transform_2(%arg0: i32) -> (i32, i32) {
    %c0_i32 = arith.constant 0 : i32
    %c0_i32_0 = arith.constant 0 : i32
    %c0_i32_1 = arith.constant 0 : i32
    return %c0_i32, %c0_i32_0 : i32, i32
  }
  func.func @transform_3(%arg0: i32) -> (i32, i32) {
    %c0_i32 = arith.constant 0 : i32
    %c0_i32_0 = arith.constant 0 : i32
    %c0_i32_1 = arith.constant 0 : i32
    return %c0_i32, %c0_i32_0 : i32, i32
  }
  func.func @transform_4(%arg0: i32) -> (i32, i32) {
    %c0_i32 = arith.constant 0 : i32
    %c0_i32_0 = arith.constant 0 : i32
    %c0_i32_1 = arith.constant 0 : i32
    return %c0_i32, %c0_i32_0 : i32, i32
  }
  func.func @transform_5(%arg0: i32) -> (i32, i32) {
    %c0_i32 = arith.constant 0 : i32
    %c0_i32_0 = arith.constant 0 : i32
    %c0_i32_1 = arith.constant 0 : i32
    return %c0_i32, %c0_i32_0 : i32, i32
  }
  func.func @transform_6(%arg0: i32) -> (i32, i32) {
    %c0_i32 = arith.constant 0 : i32
    %c0_i32_0 = arith.constant 0 : i32
    %c0_i32_1 = arith.constant 0 : i32
    return %c0_i32, %c0_i32_0 : i32, i32
  }
  func.func @transform_7(%arg0: i32) -> (i32, i32) {
    %c0_i32 = arith.constant 0 : i32
    %c0_i32_0 = arith.constant 0 : i32
    return %arg0, %c0_i32 : i32, i32
  }
}

</mosaic_0001>

<llo_original>
// kernel: tpu_custom_call.1
$region0: #{tpu_custom_call.1}
  #allocation0 [shape = 'u32[]', space=smem, size = 0x4, offset = 0x4, fixed_abs, tag = 'smem constant byte address 0x4 - core index']
  #allocation1 [shape = 'u32[144,128]{1,0:T(1,128)}', space=vmem, size = 0x12000, scoped, tag = 'internal scratch']
  %s0 = inlined_call_operand.vmem [shape: f32[8,16], index: 0, kind: input, shape index: {}]
  %s1 = inlined_call_operand.hbm [shape: f32[16,32], index: 1, kind: input, shape index: {}]
  %s2 = inlined_call_operand.vmem [shape: f32[1,32], index: 2, kind: input, shape index: {}]
  %s3 = inlined_call_operand.vmem [shape: f32[32,32], index: 3, kind: input, shape index: {}]
  %s4 = inlined_call_operand.vmem [shape: f32[1,32], index: 4, kind: input, shape index: {}]
  %s5 = inlined_call_operand.vmem [shape: f32[32,4], index: 5, kind: input, shape index: {}]
  %s6 = inlined_call_operand.vmem [shape: f32[1,4], index: 6, kind: input, shape index: {}]
  %s7 = inlined_call_operand.vmem [shape: f32[8,4], index: 7, kind: output, shape index: {}]
  %s8 = sld [smem:[#allocation0]]
  $region42: #{tpu_custom_call.1} parent=0
    _
  %s10 = ssub.s32 1, %s8
  %s11 = scalar_select 0, %s10, %s8
  $region1: #{tpu_custom_call.1} parent=0
    #allocation2 [shape = 'u8[8192]{0}', space=vmem, size = 0x2000, scoped, tag = 'input window, operand 1, single buffered']
    #allocation3 [shape = 's32[1]{0}', space=sflag, size = 0x4, scoped, tag = 'scoped memory for tpu_custom_call.1']
    %12 = vsyncpa [#allocation3], 0
    // Predicated region
    $region2: #{tpu_custom_call.1} parent=1 // pred_check
      _
    $region3: #{tpu_custom_call.1} parent=1 // pred_check_branch
      %14 = sbr.rel (0) target = $region5
    $region4: #{tpu_custom_call.1} parent=1 // pred_region
      _
    $region5: #{tpu_custom_call.1} parent=1 // pred_fallthru
      _
    // Predicated region
    $region6: #{tpu_custom_call.1} parent=1 // pred_check
      _
    $region7: #{tpu_custom_call.1} parent=1 // pred_check_branch
      %16 = sbr.rel (0) target = $region9
    $region8: #{tpu_custom_call.1} parent=1 // pred_region
      %s18 = ssub.s32 256, 256
      %19 = vsyncadd [#allocation3], %s18
      %s20 = sshll.u32 [#allocation2], 4
      %s21 = int_to_ptr.vmem [resolvable:$true] %s20
      %26 = dma.hbm_to_vmem [thread:$0]  %s1, 256, %s21, [#allocation3], 128, 128, 8
    $region9: #{tpu_custom_call.1} parent=1 // pred_fallthru
      _
    // Predicated region
    $region10: #{tpu_custom_call.1} parent=1 // pred_check
      _
    $region11: #{tpu_custom_call.1} parent=1 // pred_check_branch
      %28 = sbr.rel (0) target = $region13
    $region12: #{tpu_custom_call.1} parent=1 // pred_region
      _
    $region13: #{tpu_custom_call.1} parent=1 // pred_fallthru
      _
    // Predicated region
    $region14: #{tpu_custom_call.1} parent=1 // pred_check
      _
    $region15: #{tpu_custom_call.1} parent=1 // pred_check_branch
      %30 = sbr.rel (0) target = $region17
    $region16: #{tpu_custom_call.1} parent=1 // pred_region
      _
    $region17: #{tpu_custom_call.1} parent=1 // pred_fallthru
      _
    // Predicated region
    $region18: #{tpu_custom_call.1} parent=1 // pred_check
      _
    $region19: #{tpu_custom_call.1} parent=1 // pred_check_branch
      %32 = sbr.rel (0) target = $region21
    $region20: #{tpu_custom_call.1} parent=1 // pred_region
      _
    $region21: #{tpu_custom_call.1} parent=1 // pred_fallthru
      _
    // Predicated region
    $region22: #{tpu_custom_call.1} parent=1 // pred_check
      _
    $region23: #{tpu_custom_call.1} parent=1 // pred_check_branch
      %34 = sbr.rel (0) target = $region25
    $region24: #{tpu_custom_call.1} parent=1 // pred_region
      _
    $region25: #{tpu_custom_call.1} parent=1 // pred_fallthru
      _
    // Predicated region
    $region26: #{tpu_custom_call.1} parent=1 // pred_check
      _
    $region27: #{tpu_custom_call.1} parent=1 // pred_check_branch
      %36 = sbr.rel (0) target = $region29
    $region28: #{tpu_custom_call.1} parent=1 // pred_region
      _
    $region29: #{tpu_custom_call.1} parent=1 // pred_fallthru
      _
    // Predicated region
    $region30: #{tpu_custom_call.1} parent=1 // pred_check
      _
    $region31: #{tpu_custom_call.1} parent=1 // pred_check_branch
      %38 = sbr.rel (0) target = $region33
    $region32: #{tpu_custom_call.1} parent=1 // pred_region
      %39 = dma.done [#allocation3], 256
    $region33: #{tpu_custom_call.1} parent=1 // pred_fallthru
      _
    %v40 = vld [vmem:[%s0] sm:$0xff]
    %v41 = vld [vmem:[#allocation2] sm:$0xff]
    %v42 = vld [vmem:[#allocation2 + $0x8] sm:$0xff]
    %v43 = vld [vmem:[%s2] sm:$0x1]
    %v45 = vlaneseq
    %v46 = vshrl.u32 %v45, 7
    %v47 = vsub.s32 0, %v46
    %v48 = vrot.slane %v43, %v47
    %vm50 = vcmask 130048
    %v52 = vsel %vm50, %v40, 0
    %54 = vmatprep.subr.mxu0 0.0
    %55 = vmatpush1.msra.mxu0 %v41
    %56 = vmatprep.subr.mxu0 0.0
    %57 = vmatpush1.msra.mxu0 %v42
    %58 = vmatprep.subr.mxu0 0.0
    %59 = vmatpush1.msra.mxu0 0.0
    %60 = vmatprep.subr.mxu0 0.0
    %61 = vmatpush1.msra.mxu0 0.0
    %62 = vmatprep.subr.mxu0 0.0
    %63 = vmatpush1.msra.mxu0 0.0
    %64 = vmatprep.subr.mxu0 0.0
    %65 = vmatpush1.msra.mxu0 0.0
    %66 = vmatprep.subr.mxu0 0.0
    %67 = vmatpush1.msra.mxu0 0.0
    %68 = vmatprep.subr.mxu0 0.0
    %69 = vmatpush1.msra.mxu0 0.0
    %70 = vmatprep.subr.mxu0 0.0
    %71 = vmatpush1.msra.mxu0 0.0
    %72 = vmatprep.subr.mxu0 0.0
    %73 = vmatpush1.msra.mxu0 0.0
    %74 = vmatprep.subr.mxu0 0.0
    %75 = vmatpush1.msra.mxu0 0.0
    %76 = vmatprep.subr.mxu0 0.0
    %77 = vmatpush1.msra.mxu0 0.0
    %78 = vmatprep.subr.mxu0 0.0
    %79 = vmatpush1.msra.mxu0 0.0
    %80 = vmatprep.subr.mxu0 0.0
    %81 = vmatpush1.msra.mxu0 0.0
    %82 = vmatprep.subr.mxu0 0.0
    %83 = vmatpush1.msra.mxu0 0.0
    %84 = vmatprep.subr.mxu0 0.0
    %85 = vmatpush1.msra.mxu0 0.0
    %86 = vmatprep.subr.mxu0 0.0
    %87 = vmatpush1.msra.mxu0 0.0
    %88 = vmatprep.subr.mxu0 0.0
    %89 = vmatpush1.msra.mxu0 0.0
    %90 = vmatprep.subr.mxu0 0.0
    %91 = vmatpush1.msra.mxu0 0.0
    %92 = vmatprep.subr.mxu0 0.0
    %93 = vmatpush1.msra.mxu0 0.0
    %94 = vmatprep.subr.mxu0 0.0
    %95 = vmatpush1.msra.mxu0 0.0
    %96 = vmatprep.subr.mxu0 0.0
    %97 = vmatpush1.msra.mxu0 0.0
    %98 = vmatprep.subr.mxu0 0.0
    %99 = vmatpush1.msra.mxu0 0.0
    %100 = vmatprep.subr.mxu0 0.0
    %101 = vmatpush1.msra.mxu0 0.0
    %102 = vmatprep.subr.mxu0 0.0
    %103 = vmatpush1.msra.mxu0 0.0
    %104 = vmatprep.subr.mxu0 0.0
    %105 = vmatpush1.msra.mxu0 0.0
    %106 = vmatprep.subr.mxu0 0.0
    %107 = vmatpush1.msra.mxu0 0.0
    %108 = vmatprep.subr.mxu0 0.0
    %109 = vmatpush1.msra.mxu0 0.0
    %110 = vmatprep.subr.mxu0 0.0
    %111 = vmatpush1.msra.mxu0 0.0
    %112 = vmatprep.subr.mxu0 0.0
    %113 = vmatpush1.msra.mxu0 0.0
    %114 = vmatprep.subr.mxu0 0.0
    %115 = vmatpush1.msra.mxu0 0.0
    %116 = vmatprep.subr.mxu0 0.0
    %117 = vmatpush1.msra.mxu0 0.0
    %118 = vmatprep.mubr.f32.mxu0 0.0
    %119 = vmatmul.mubr.f32.gmra.mrb[0].mxu0 %v52
    %v120 = vpop.f32.mrb[0].mxu0
    %v121 = vadd.f32 %v48, %v120
    %v122 = vpop.f32.mrb[0].mxu0
    %123 = vdwg.mxu0
    %v124 = vmax.f32 %v121, 0.0
    %v125 = vld [vmem:[%s3] sm:$0xff]
    %v126 = vld [vmem:[%s3 + $0x8] sm:$0xff]
    %v127 = vld [vmem:[%s3 + $0x10] sm:$0xff]
    %v128 = vld [vmem:[%s3 + $0x18] sm:$0xff]
    %v129 = vld [vmem:[%s4] sm:$0x1]
    %v131 = vlaneseq
    %v132 = vshrl.u32 %v131, 7
    %v133 = vsub.s32 0, %v132
    %v134 = vrot.slane %v129, %v133
    %vm136 = vcmask 261120
    %v138 = vsel %vm136, %v124, 0
    %140 = vmatprep.subr.mxu0 0.0
    %141 = vmatpush1.msra.mxu0 %v125
    %142 = vmatprep.subr.mxu0 0.0
    %143 = vmatpush1.msra.mxu0 %v126
    %144 = vmatprep.subr.mxu0 0.0
    %145 = vmatpush1.msra.mxu0 %v127
    %146 = vmatprep.subr.mxu0 0.0
    %147 = vmatpush1.msra.mxu0 %v128
    %148 = vmatprep.subr.mxu0 0.0
    %149 = vmatpush1.msra.mxu0 0.0
    %150 = vmatprep.subr.mxu0 0.0
    %151 = vmatpush1.msra.mxu0 0.0
    %152 = vmatprep.subr.mxu0 0.0
    %153 = vmatpush1.msra.mxu0 0.0
    %154 = vmatprep.subr.mxu0 0.0
    %155 = vmatpush1.msra.mxu0 0.0
    %156 = vmatprep.subr.mxu0 0.0
    %157 = vmatpush1.msra.mxu0 0.0
    %158 = vmatprep.subr.mxu0 0.0
    %159 = vmatpush1.msra.mxu0 0.0
    %160 = vmatprep.subr.mxu0 0.0
    %161 = vmatpush1.msra.mxu0 0.0
    %162 = vmatprep.subr.mxu0 0.0
    %163 = vmatpush1.msra.mxu0 0.0
    %164 = vmatprep.subr.mxu0 0.0
    %165 = vmatpush1.msra.mxu0 0.0
    %166 = vmatprep.subr.mxu0 0.0
    %167 = vmatpush1.msra.mxu0 0.0
    %168 = vmatprep.subr.mxu0 0.0
    %169 = vmatpush1.msra.mxu0 0.0
    %170 = vmatprep.subr.mxu0 0.0
    %171 = vmatpush1.msra.mxu0 0.0
    %172 = vmatprep.subr.mxu0 0.0
    %173 = vmatpush1.msra.mxu0 0.0
    %174 = vmatprep.subr.mxu0 0.0
    %175 = vmatpush1.msra.mxu0 0.0
    %176 = vmatprep.subr.mxu0 0.0
    %177 = vmatpush1.msra.mxu0 0.0
    %178 = vmatprep.subr.mxu0 0.0
    %179 = vmatpush1.msra.mxu0 0.0
    %180 = vmatprep.subr.mxu0 0.0
    %181 = vmatpush1.msra.mxu0 0.0
    %182 = vmatprep.subr.mxu0 0.0
    %183 = vmatpush1.msra.mxu0 0.0
    %184 = vmatprep.subr.mxu0 0.0
    %185 = vmatpush1.msra.mxu0 0.0
    %186 = vmatprep.subr.mxu0 0.0
    %187 = vmatpush1.msra.mxu0 0.0
    %188 = vmatprep.subr.mxu0 0.0
    %189 = vmatpush1.msra.mxu0 0.0
    %190 = vmatprep.subr.mxu0 0.0
    %191 = vmatpush1.msra.mxu0 0.0
    %192 = vmatprep.subr.mxu0 0.0
    %193 = vmatpush1.msra.mxu0 0.0
    %194 = vmatprep.subr.mxu0 0.0
    %195 = vmatpush1.msra.mxu0 0.0
    %196 = vmatprep.subr.mxu0 0.0
    %197 = vmatpush1.msra.mxu0 0.0
    %198 = vmatprep.subr.mxu0 0.0
    %199 = vmatpush1.msra.mxu0 0.0
    %200 = vmatprep.subr.mxu0 0.0
    %201 = vmatpush1.msra.mxu0 0.0
    %202 = vmatprep.subr.mxu0 0.0
    %203 = vmatpush1.msra.mxu0 0.0
    %204 = vmatprep.mubr.f32.mxu0 0.0
    %205 = vmatmul.mubr.f32.gmra.mrb[0].mxu0 %v138
    %v206 = vpop.f32.mrb[0].mxu0
    %v207 = vadd.f32 %v134, %v206
    %v208 = vpop.f32.mrb[0].mxu0
    %209 = vdwg.mxu0
    %v210 = vmax.f32 %v207, 0.0
    %v211 = vld [vmem:[%s5] sm:$0xff]
    %v212 = vld [vmem:[%s5 + $0x8] sm:$0xff]
    %v213 = vld [vmem:[%s5 + $0x10] sm:$0xff]
    %v214 = vld [vmem:[%s5 + $0x18] sm:$0xff]
    %v215 = vld [vmem:[%s6] sm:$0x1]
    %v217 = vlaneseq
    %v218 = vshrl.u32 %v217, 7
    %v219 = vsub.s32 0, %v218
    %v220 = vrot.slane %v215, %v219
    %v223 = vsel %vm136, %v210, 0
    %225 = vmatprep.subr.mxu0 0.0
    %226 = vmatpush1.msra.mxu0 %v211
    %227 = vmatprep.subr.mxu0 0.0
    %228 = vmatpush1.msra.mxu0 %v212
    %229 = vmatprep.subr.mxu0 0.0
    %230 = vmatpush1.msra.mxu0 %v213
    %231 = vmatprep.subr.mxu0 0.0
    %232 = vmatpush1.msra.mxu0 %v214
    %233 = vmatprep.subr.mxu0 0.0
    %234 = vmatpush1.msra.mxu0 0.0
    %235 = vmatprep.subr.mxu0 0.0
    %236 = vmatpush1.msra.mxu0 0.0
    %237 = vmatprep.subr.mxu0 0.0
    %238 = vmatpush1.msra.mxu0 0.0
    %239 = vmatprep.subr.mxu0 0.0
    %240 = vmatpush1.msra.mxu0 0.0
    %241 = vmatprep.subr.mxu0 0.0
    %242 = vmatpush1.msra.mxu0 0.0
    %243 = vmatprep.subr.mxu0 0.0
    %244 = vmatpush1.msra.mxu0 0.0
    %245 = vmatprep.subr.mxu0 0.0
    %246 = vmatpush1.msra.mxu0 0.0
    %247 = vmatprep.subr.mxu0 0.0
    %248 = vmatpush1.msra.mxu0 0.0
    %249 = vmatprep.subr.mxu0 0.0
    %250 = vmatpush1.msra.mxu0 0.0
    %251 = vmatprep.subr.mxu0 0.0
    %252 = vmatpush1.msra.mxu0 0.0
    %253 = vmatprep.subr.mxu0 0.0
    %254 = vmatpush1.msra.mxu0 0.0
    %255 = vmatprep.subr.mxu0 0.0
    %256 = vmatpush1.msra.mxu0 0.0
    %257 = vmatprep.subr.mxu0 0.0
    %258 = vmatpush1.msra.mxu0 0.0
    %259 = vmatprep.subr.mxu0 0.0
    %260 = vmatpush1.msra.mxu0 0.0
    %261 = vmatprep.subr.mxu0 0.0
    %262 = vmatpush1.msra.mxu0 0.0
    %263 = vmatprep.subr.mxu0 0.0
    %264 = vmatpush1.msra.mxu0 0.0
    %265 = vmatprep.subr.mxu0 0.0
    %266 = vmatpush1.msra.mxu0 0.0
    %267 = vmatprep.subr.mxu0 0.0
    %268 = vmatpush1.msra.mxu0 0.0
    %269 = vmatprep.subr.mxu0 0.0
    %270 = vmatpush1.msra.mxu0 0.0
    %271 = vmatprep.subr.mxu0 0.0
    %272 = vmatpush1.msra.mxu0 0.0
    %273 = vmatprep.subr.mxu0 0.0
    %274 = vmatpush1.msra.mxu0 0.0
    %275 = vmatprep.subr.mxu0 0.0
    %276 = vmatpush1.msra.mxu0 0.0
    %277 = vmatprep.subr.mxu0 0.0
    %278 = vmatpush1.msra.mxu0 0.0
    %279 = vmatprep.subr.mxu0 0.0
    %280 = vmatpush1.msra.mxu0 0.0
    %281 = vmatprep.subr.mxu0 0.0
    %282 = vmatpush1.msra.mxu0 0.0
    %283 = vmatprep.subr.mxu0 0.0
    %284 = vmatpush1.msra.mxu0 0.0
    %285 = vmatprep.subr.mxu0 0.0
    %286 = vmatpush1.msra.mxu0 0.0
    %287 = vmatprep.subr.mxu0 0.0
    %288 = vmatpush1.msra.mxu0 0.0
    %289 = vmatprep.mubr.f32.mxu0 0.0
    %290 = vmatmul.mubr.f32.gmra.mrb[0].mxu0 %v223
    %v291 = vpop.f32.mrb[0].mxu0
    %v292 = vadd.f32 %v220, %v291
    %v293 = vpop.f32.mrb[0].mxu0
    %294 = vdwg.mxu0
    %v295 = vtanh.pop %v292
    %vm296 = vcmask 31744
    %297 = vst.msk [vmem:[%s7] sm:$0xff] %vm296, %v295
    // Predicated region
    $region34: #{tpu_custom_call.1} parent=1 // pred_check
      _
    $region35: #{tpu_custom_call.1} parent=1 // pred_check_branch
      %299 = sbr.rel (0) target = $region37
    $region36: #{tpu_custom_call.1} parent=1 // pred_region
      _
    $region37: #{tpu_custom_call.1} parent=1 // pred_fallthru
      _
    // Predicated region
    $region38: #{tpu_custom_call.1} parent=1 // pred_check
      _
    $region39: #{tpu_custom_call.1} parent=1 // pred_check_branch
      %301 = sbr.rel (0) target = $region41
    $region40: #{tpu_custom_call.1} parent=1 // pred_region
      _
    $region41: #{tpu_custom_call.1} parent=1 // pred_fallthru
      _
    %302 = vsyncpa [#allocation3], 1

// kernel: tpu_custom_call.1
$region0: #{tpu_custom_call.1}
  #allocation0 [shape = 'u32[]', space=smem, size = 0x4, offset = 0x4, fixed_abs, tag = 'smem constant byte address 0x4 - core index']
  #allocation1 [shape = 'u32[144,128]{1,0:T(1,128)}', space=vmem, size = 0x12000, scoped, tag = 'internal scratch']
  %s0 = inlined_call_operand.vmem [shape: f32[8,16], index: 0, kind: input, shape index: {}]
  %s1 = inlined_call_operand.hbm [shape: f32[16,32], index: 1, kind: input, shape index: {}]
  %s2 = inlined_call_operand.vmem [shape: f32[1,32], index: 2, kind: input, shape index: {}]
  %s3 = inlined_call_operand.vmem [shape: f32[32,32], index: 3, kind: input, shape index: {}]
  %s4 = inlined_call_operand.vmem [shape: f32[1,32], index: 4, kind: input, shape index: {}]
  %s5 = inlined_call_operand.vmem [shape: f32[32,4], index: 5, kind: input, shape index: {}]
  %s6 = inlined_call_operand.vmem [shape: f32[1,4], index: 6, kind: input, shape index: {}]
  %s7 = inlined_call_operand.vmem [shape: f32[8,4], index: 7, kind: output, shape index: {}]
  %s8 = sld [smem:[#allocation0]]
  $region42: #{tpu_custom_call.1} parent=0
    _
  %s10 = ssub.s32 1, %s8
  %s11 = scalar_select 0, %s10, %s8
  $region1: #{tpu_custom_call.1} parent=0
    #allocation2 [shape = 'u8[8192]{0}', space=vmem, size = 0x2000, scoped, tag = 'input window, operand 1, single buffered']
    #allocation3 [shape = 's32[1]{0}', space=sflag, size = 0x4, scoped, tag = 'scoped memory for tpu_custom_call.1']
    %12 = vsyncpa [#allocation3], 0
    // Predicated region
    $region2: #{tpu_custom_call.1} parent=1 // pred_check
      _
    $region3: #{tpu_custom_call.1} parent=1 // pred_check_branch
      %14 = sbr.rel (0) target = $region5
    $region4: #{tpu_custom_call.1} parent=1 // pred_region
      _
    $region5: #{tpu_custom_call.1} parent=1 // pred_fallthru
      _
    // Predicated region
    $region6: #{tpu_custom_call.1} parent=1 // pred_check
      _
    $region7: #{tpu_custom_call.1} parent=1 // pred_check_branch
      %16 = sbr.rel (0) target = $region9
    $region8: #{tpu_custom_call.1} parent=1 // pred_region
      %s18 = ssub.s32 256, 256
      %19 = vsyncadd [#allocation3], %s18
      %s20 = sshll.u32 [#allocation2], 4
      %s21 = int_to_ptr.vmem [resolvable:$true] %s20
      %26 = dma.hbm_to_vmem [thread:$0]  %s1, 256, %s21, [#allocation3], 128, 128, 8
    $region9: #{tpu_custom_call.1} parent=1 // pred_fallthru
      _
    // Predicated region
    $region10: #{tpu_custom_call.1} parent=1 // pred_check
      _
    $region11: #{tpu_custom_call.1} parent=1 // pred_check_branch
      %28 = sbr.rel (0) target = $region13
    $region12: #{tpu_custom_call.1} parent=1 // pred_region
      _
    $region13: #{tpu_custom_call.1} parent=1 // pred_fallthru
      _
    // Predicated region
    $region14: #{tpu_custom_call.1} parent=1 // pred_check
      _
    $region15: #{tpu_custom_call.1} parent=1 // pred_check_branch
      %30 = sbr.rel (0) target = $region17
    $region16: #{tpu_custom_call.1} parent=1 // pred_region
      _
    $region17: #{tpu_custom_call.1} parent=1 // pred_fallthru
      _
    // Predicated region
    $region18: #{tpu_custom_call.1} parent=1 // pred_check
      _
    $region19: #{tpu_custom_call.1} parent=1 // pred_check_branch
      %32 = sbr.rel (0) target = $region21
    $region20: #{tpu_custom_call.1} parent=1 // pred_region
      _
    $region21: #{tpu_custom_call.1} parent=1 // pred_fallthru
      _
    // Predicated region
    $region22: #{tpu_custom_call.1} parent=1 // pred_check
      _
    $region23: #{tpu_custom_call.1} parent=1 // pred_check_branch
      %34 = sbr.rel (0) target = $region25
    $region24: #{tpu_custom_call.1} parent=1 // pred_region
      _
    $region25: #{tpu_custom_call.1} parent=1 // pred_fallthru
      _
    // Predicated region
    $region26: #{tpu_custom_call.1} parent=1 // pred_check
      _
    $region27: #{tpu_custom_call.1} parent=1 // pred_check_branch
      %36 = sbr.rel (0) target = $region29
    $region28: #{tpu_custom_call.1} parent=1 // pred_region
      _
    $region29: #{tpu_custom_call.1} parent=1 // pred_fallthru
      _
    // Predicated region
    $region30: #{tpu_custom_call.1} parent=1 // pred_check
      _
    $region31: #{tpu_custom_call.1} parent=1 // pred_check_branch
      %38 = sbr.rel (0) target = $region33
    $region32: #{tpu_custom_call.1} parent=1 // pred_region
      %39 = dma.done [#allocation3], 256
    $region33: #{tpu_custom_call.1} parent=1 // pred_fallthru
      _
    %v40 = vld [vmem:[%s0] sm:$0xff]
    %v41 = vld [vmem:[#allocation2] sm:$0xff]
    %v42 = vld [vmem:[#allocation2 + $0x8] sm:$0xff]
    %v43 = vld [vmem:[%s2] sm:$0x1]
    %v45 = vlaneseq
    %v46 = vshrl.u32 %v45, 7
    %v47 = vsub.s32 0, %v46
    %v48 = vrot.slane %v43, %v47
    %vm50 = vcmask 130048
    %v52 = vsel %vm50, %v40, 0
    %54 = vmatprep.subr.mxu0 0.0
    %55 = vmatpush1.msra.mxu0 %v41
    %56 = vmatprep.subr.mxu0 0.0
    %57 = vmatpush1.msra.mxu0 %v42
    %58 = vmatprep.subr.mxu0 0.0
    %59 = vmatpush1.msra.mxu0 0.0
    %60 = vmatprep.subr.mxu0 0.0
    %61 = vmatpush1.msra.mxu0 0.0
    %62 = vmatprep.subr.mxu0 0.0
    %63 = vmatpush1.msra.mxu0 0.0
    %64 = vmatprep.subr.mxu0 0.0
    %65 = vmatpush1.msra.mxu0 0.0
    %66 = vmatprep.subr.mxu0 0.0
    %67 = vmatpush1.msra.mxu0 0.0
    %68 = vmatprep.subr.mxu0 0.0
    %69 = vmatpush1.msra.mxu0 0.0
    %70 = vmatprep.subr.mxu0 0.0
    %71 = vmatpush1.msra.mxu0 0.0
    %72 = vmatprep.subr.mxu0 0.0
    %73 = vmatpush1.msra.mxu0 0.0
    %74 = vmatprep.subr.mxu0 0.0
    %75 = vmatpush1.msra.mxu0 0.0
    %76 = vmatprep.subr.mxu0 0.0
    %77 = vmatpush1.msra.mxu0 0.0
    %78 = vmatprep.subr.mxu0 0.0
    %79 = vmatpush1.msra.mxu0 0.0
    %80 = vmatprep.subr.mxu0 0.0
    %81 = vmatpush1.msra.mxu0 0.0
    %82 = vmatprep.subr.mxu0 0.0
    %83 = vmatpush1.msra.mxu0 0.0
    %84 = vmatprep.subr.mxu0 0.0
    %85 = vmatpush1.msra.mxu0 0.0
    %86 = vmatprep.subr.mxu0 0.0
    %87 = vmatpush1.msra.mxu0 0.0
    %88 = vmatprep.subr.mxu0 0.0
    %89 = vmatpush1.msra.mxu0 0.0
    %90 = vmatprep.subr.mxu0 0.0
    %91 = vmatpush1.msra.mxu0 0.0
    %92 = vmatprep.subr.mxu0 0.0
    %93 = vmatpush1.msra.mxu0 0.0
    %94 = vmatprep.subr.mxu0 0.0
    %95 = vmatpush1.msra.mxu0 0.0
    %96 = vmatprep.subr.mxu0 0.0
    %97 = vmatpush1.msra.mxu0 0.0
    %98 = vmatprep.subr.mxu0 0.0
    %99 = vmatpush1.msra.mxu0 0.0
    %100 = vmatprep.subr.mxu0 0.0
    %101 = vmatpush1.msra.mxu0 0.0
    %102 = vmatprep.subr.mxu0 0.0
    %103 = vmatpush1.msra.mxu0 0.0
    %104 = vmatprep.subr.mxu0 0.0
    %105 = vmatpush1.msra.mxu0 0.0
    %106 = vmatprep.subr.mxu0 0.0
    %107 = vmatpush1.msra.mxu0 0.0
    %108 = vmatprep.subr.mxu0 0.0
    %109 = vmatpush1.msra.mxu0 0.0
    %110 = vmatprep.subr.mxu0 0.0
    %111 = vmatpush1.msra.mxu0 0.0
    %112 = vmatprep.subr.mxu0 0.0
    %113 = vmatpush1.msra.mxu0 0.0
    %114 = vmatprep.subr.mxu0 0.0
    %115 = vmatpush1.msra.mxu0 0.0
    %116 = vmatprep.subr.mxu0 0.0
    %117 = vmatpush1.msra.mxu0 0.0
    %118 = vmatprep.mubr.f32.mxu0 0.0
    %119 = vmatmul.mubr.f32.gmra.mrb[0].mxu0 %v52
    %v120 = vpop.f32.mrb[0].mxu0
    %v121 = vadd.f32 %v48, %v120
    %v122 = vpop.f32.mrb[0].mxu0
    %123 = vdwg.mxu0
    %v124 = vmax.f32 %v121, 0.0
    %v125 = vld [vmem:[%s3] sm:$0xff]
    %v126 = vld [vmem:[%s3 + $0x8] sm:$0xff]
    %v127 = vld [vmem:[%s3 + $0x10] sm:$0xff]
    %v128 = vld [vmem:[%s3 + $0x18] sm:$0xff]
    %v129 = vld [vmem:[%s4] sm:$0x1]
    %v131 = vlaneseq
    %v132 = vshrl.u32 %v131, 7
    %v133 = vsub.s32 0, %v132
    %v134 = vrot.slane %v129, %v133
    %vm136 = vcmask 261120
    %v138 = vsel %vm136, %v124, 0
    %140 = vmatprep.subr.mxu0 0.0
    %141 = vmatpush1.msra.mxu0 %v125
    %142 = vmatprep.subr.mxu0 0.0
    %143 = vmatpush1.msra.mxu0 %v126
    %144 = vmatprep.subr.mxu0 0.0
    %145 = vmatpush1.msra.mxu0 %v127
    %146 = vmatprep.subr.mxu0 0.0
    %147 = vmatpush1.msra.mxu0 %v128
    %148 = vmatprep.subr.mxu0 0.0
    %149 = vmatpush1.msra.mxu0 0.0
    %150 = vmatprep.subr.mxu0 0.0
    %151 = vmatpush1.msra.mxu0 0.0
    %152 = vmatprep.subr.mxu0 0.0
    %153 = vmatpush1.msra.mxu0 0.0
    %154 = vmatprep.subr.mxu0 0.0
    %155 = vmatpush1.msra.mxu0 0.0
    %156 = vmatprep.subr.mxu0 0.0
    %157 = vmatpush1.msra.mxu0 0.0
    %158 = vmatprep.subr.mxu0 0.0
    %159 = vmatpush1.msra.mxu0 0.0
    %160 = vmatprep.subr.mxu0 0.0
    %161 = vmatpush1.msra.mxu0 0.0
    %162 = vmatprep.subr.mxu0 0.0
    %163 = vmatpush1.msra.mxu0 0.0
    %164 = vmatprep.subr.mxu0 0.0
    %165 = vmatpush1.msra.mxu0 0.0
    %166 = vmatprep.subr.mxu0 0.0
    %167 = vmatpush1.msra.mxu0 0.0
    %168 = vmatprep.subr.mxu0 0.0
    %169 = vmatpush1.msra.mxu0 0.0
    %170 = vmatprep.subr.mxu0 0.0
    %171 = vmatpush1.msra.mxu0 0.0
    %172 = vmatprep.subr.mxu0 0.0
    %173 = vmatpush1.msra.mxu0 0.0
    %174 = vmatprep.subr.mxu0 0.0
    %175 = vmatpush1.msra.mxu0 0.0
    %176 = vmatprep.subr.mxu0 0.0
    %177 = vmatpush1.msra.mxu0 0.0
    %178 = vmatprep.subr.mxu0 0.0
    %179 = vmatpush1.msra.mxu0 0.0
    %180 = vmatprep.subr.mxu0 0.0
    %181 = vmatpush1.msra.mxu0 0.0
    %182 = vmatprep.subr.mxu0 0.0
    %183 = vmatpush1.msra.mxu0 0.0
    %184 = vmatprep.subr.mxu0 0.0
    %185 = vmatpush1.msra.mxu0 0.0
    %186 = vmatprep.subr.mxu0 0.0
    %187 = vmatpush1.msra.mxu0 0.0
    %188 = vmatprep.subr.mxu0 0.0
    %189 = vmatpush1.msra.mxu0 0.0
    %190 = vmatprep.subr.mxu0 0.0
    %191 = vmatpush1.msra.mxu0 0.0
    %192 = vmatprep.subr.mxu0 0.0
    %193 = vmatpush1.msra.mxu0 0.0
    %194 = vmatprep.subr.mxu0 0.0
    %195 = vmatpush1.msra.mxu0 0.0
    %196 = vmatprep.subr.mxu0 0.0
    %197 = vmatpush1.msra.mxu0 0.0
    %198 = vmatprep.subr.mxu0 0.0
    %199 = vmatpush1.msra.mxu0 0.0
    %200 = vmatprep.subr.mxu0 0.0
    %201 = vmatpush1.msra.mxu0 0.0
    %202 = vmatprep.subr.mxu0 0.0
    %203 = vmatpush1.msra.mxu0 0.0
    %204 = vmatprep.mubr.f32.mxu0 0.0
    %205 = vmatmul.mubr.f32.gmra.mrb[0].mxu0 %v138
    %v206 = vpop.f32.mrb[0].mxu0
    %v207 = vadd.f32 %v134, %v206
    %v208 = vpop.f32.mrb[0].mxu0
    %209 = vdwg.mxu0
    %v210 = vmax.f32 %v207, 0.0
    %v211 = vld [vmem:[%s5] sm:$0xff]
    %v212 = vld [vmem:[%s5 + $0x8] sm:$0xff]
    %v213 = vld [vmem:[%s5 + $0x10] sm:$0xff]
    %v214 = vld [vmem:[%s5 + $0x18] sm:$0xff]
    %v215 = vld [vmem:[%s6] sm:$0x1]
    %v217 = vlaneseq
    %v218 = vshrl.u32 %v217, 7
    %v219 = vsub.s32 0, %v218
    %v220 = vrot.slane %v215, %v219
    %v223 = vsel %vm136, %v210, 0
    %225 = vmatprep.subr.mxu0 0.0
    %226 = vmatpush1.msra.mxu0 %v211
    %227 = vmatprep.subr.mxu0 0.0
    %228 = vmatpush1.msra.mxu0 %v212
    %229 = vmatprep.subr.mxu0 0.0
    %230 = vmatpush1.msra.mxu0 %v213
    %231 = vmatprep.subr.mxu0 0.0
    %232 = vmatpush1.msra.mxu0 %v214
    %233 = vmatprep.subr.mxu0 0.0
    %234 = vmatpush1.msra.mxu0 0.0
    %235 = vmatprep.subr.mxu0 0.0
    %236 = vmatpush1.msra.mxu0 0.0
    %237 = vmatprep.subr.mxu0 0.0
    %238 = vmatpush1.msra.mxu0 0.0
    %239 = vmatprep.subr.mxu0 0.0
    %240 = vmatpush1.msra.mxu0 0.0
    %241 = vmatprep.subr.mxu0 0.0
    %242 = vmatpush1.msra.mxu0 0.0
    %243 = vmatprep.subr.mxu0 0.0
    %244 = vmatpush1.msra.mxu0 0.0
    %245 = vmatprep.subr.mxu0 0.0
    %246 = vmatpush1.msra.mxu0 0.0
    %247 = vmatprep.subr.mxu0 0.0
    %248 = vmatpush1.msra.mxu0 0.0
    %249 = vmatprep.subr.mxu0 0.0
    %250 = vmatpush1.msra.mxu0 0.0
    %251 = vmatprep.subr.mxu0 0.0
    %252 = vmatpush1.msra.mxu0 0.0
    %253 = vmatprep.subr.mxu0 0.0
    %254 = vmatpush1.msra.mxu0 0.0
    %255 = vmatprep.subr.mxu0 0.0
    %256 = vmatpush1.msra.mxu0 0.0
    %257 = vmatprep.subr.mxu0 0.0
    %258 = vmatpush1.msra.mxu0 0.0
    %259 = vmatprep.subr.mxu0 0.0
    %260 = vmatpush1.msra.mxu0 0.0
    %261 = vmatprep.subr.mxu0 0.0
    %262 = vmatpush1.msra.mxu0 0.0
    %263 = vmatprep.subr.mxu0 0.0
    %264 = vmatpush1.msra.mxu0 0.0
    %265 = vmatprep.subr.mxu0 0.0
    %266 = vmatpush1.msra.mxu0 0.0
    %267 = vmatprep.subr.mxu0 0.0
    %268 = vmatpush1.msra.mxu0 0.0
    %269 = vmatprep.subr.mxu0 0.0
    %270 = vmatpush1.msra.mxu0 0.0
    %271 = vmatprep.subr.mxu0 0.0
    %272 = vmatpush1.msra.mxu0 0.0
    %273 = vmatprep.subr.mxu0 0.0
    %274 = vmatpush1.msra.mxu0 0.0
    %275 = vmatprep.subr.mxu0 0.0
    %276 = vmatpush1.msra.mxu0 0.0
    %277 = vmatprep.subr.mxu0 0.0
    %278 = vmatpush1.msra.mxu0 0.0
    %279 = vmatprep.subr.mxu0 0.0
    %280 = vmatpush1.msra.mxu0 0.0
    %281 = vmatprep.subr.mxu0 0.0
    %282 = vmatpush1.msra.mxu0 0.0
    %283 = vmatprep.subr.mxu0 0.0
    %284 = vmatpush1.msra.mxu0 0.0
    %285 = vmatprep.subr.mxu0 0.0
    %286 = vmatpush1.msra.mxu0 0.0
    %287 = vmatprep.subr.mxu0 0.0
    %288 = vmatpush1.msra.mxu0 0.0
    %289 = vmatprep.mubr.f32.mxu0 0.0
    %290 = vmatmul.mubr.f32.gmra.mrb[0].mxu0 %v223
    %v291 = vpop.f32.mrb[0].mxu0
    %v292 = vadd.f32 %v220, %v291
    %v293 = vpop.f32.mrb[0].mxu0
    %294 = vdwg.mxu0
    %v295 = vtanh.pop %v292
    %vm296 = vcmask 31744
    %297 = vst.msk [vmem:[%s7] sm:$0xff] %vm296, %v295
    // Predicated region
    $region34: #{tpu_custom_call.1} parent=1 // pred_check
      _
    $region35: #{tpu_custom_call.1} parent=1 // pred_check_branch
      %299 = sbr.rel (0) target = $region37
    $region36: #{tpu_custom_call.1} parent=1 // pred_region
      _
    $region37: #{tpu_custom_call.1} parent=1 // pred_fallthru
      _
    // Predicated region
    $region38: #{tpu_custom_call.1} parent=1 // pred_check
      _
    $region39: #{tpu_custom_call.1} parent=1 // pred_check_branch
      %301 = sbr.rel (0) target = $region41
    $region40: #{tpu_custom_call.1} parent=1 // pred_region
      _
    $region41: #{tpu_custom_call.1} parent=1 // pred_fallthru
      _
    %302 = vsyncpa [#allocation3], 1

</llo_original>
